<compile_context>
chip_gen: v6e
topology: v6e:2x2x1
jax: 0.10.0
libtpu: 0.0.40
codegen_flags: <defaults>
</compile_context>

<pallas_src>
import jax
import jax.numpy as jnp
from jax.experimental import pallas as pl
from jax.experimental.pallas import tpu as pltpu

# ---------------- model hyper-parameters (small, consistent with module) ------
BATCH = 8
INPUT_DIM = 16
OUTPUT_DIM = 4
PROJ_DIM = 32
HIDDEN_DIMS = (64, 32)
MODULUS = 7.0
TAU = 0.2
BN_EPS = 1e-5

INV_MODULUS = 1.0 / MODULUS          # constant multiply stays on VPU ALU slots
NEG_INV_TAU = -1.0 / TAU

# Dropping the max-subtraction in the logsumexp is only safe while
# exp(-MODULUS/TAU) stays well clear of f32 underflow (7/0.2 = 35 is fine).
assert MODULUS / TAU < 60.0, "reinstate max-subtraction in logsumexp"


def _round_up(n, m):
    return ((n + m - 1) // m) * m


# ---------------- parameter slab layout (rows are sublane-tile aligned) -------
ROW_WP = 0                                   # [INPUT_DIM, PROJ_DIM]      rows   0:16
ROW_W1 = ROW_WP + INPUT_DIM                  # [PROJ_DIM, HIDDEN0]        rows  16:48
ROW_W2 = ROW_W1 + PROJ_DIM                   # [HIDDEN0, HIDDEN1]         rows  48:112
ROW_WO = ROW_W2 + HIDDEN_DIMS[0]             # [HIDDEN1, OUTPUT_DIM]      rows 112:144
ROW_BP = ROW_WO + HIDDEN_DIMS[1]             # bias rows                  rows 144:148
ROW_B1 = ROW_BP + 1
ROW_B2 = ROW_B1 + 1
ROW_BO = ROW_B2 + 1
SLAB_ROWS = _round_up(ROW_BO + 1, 8)         # 152
SLAB_LANES = 128
assert all(r % 8 == 0 for r in (ROW_WP, ROW_W1, ROW_W2, ROW_WO, ROW_BP))


def _soft_mod(z):
    """torch.remainder forward semantics (result sign follows the divisor)."""
    return z - MODULUS * jnp.floor(z * INV_MODULUS)


def _cyclic_tropical_kernel(x_ref, slab_ref, o_ref):
    x = x_ref[...].astype(jnp.float32)

    # One resident slab holds every parameter; static, tile-aligned slices are
    # free (row offsets are multiples of 8 sublanes, lane offsets are 0).
    slab = slab_ref[...]
    wp = slab[ROW_WP:ROW_WP + INPUT_DIM, :PROJ_DIM]
    w1 = slab[ROW_W1:ROW_W1 + PROJ_DIM, :HIDDEN_DIMS[0]]
    w2 = slab[ROW_W2:ROW_W2 + HIDDEN_DIMS[0], :HIDDEN_DIMS[1]]   # BN1 pre-folded
    wo = slab[ROW_WO:ROW_WO + HIDDEN_DIMS[1], :OUTPUT_DIM]       # BN2 pre-folded
    bp = slab[ROW_BP:ROW_BP + 1, :PROJ_DIM]
    b1 = slab[ROW_B1:ROW_B1 + 1, :HIDDEN_DIMS[0]]
    b2 = slab[ROW_B2:ROW_B2 + 1, :HIDDEN_DIMS[1]]
    bo = slab[ROW_BO:ROW_BO + 1, :OUTPUT_DIM]

    # --- 1) projection -------------------------------------------------------
    z = jnp.dot(x, wp, preferred_element_type=jnp.float32) + bp

    # --- 2) cyclic (group-like) transform: z mod MODULUS ----------------------
    z = _soft_mod(z)

    # --- 3) tropical soft max-plus aggregation of pairwise differences --------
    # y_i = TAU*logsumexp_j((z_i - z_j)/TAU) = z_i + TAU*log(sum_j exp(-z_j/TAU))
    # After the mod, z in [0, MODULUS), so exp(-z/TAU) in (exp(-35), 1]: safe in
    # f32 without max-subtraction (saves one XLU reduce + VPU sub).
    lse = jnp.log(jnp.sum(jnp.exp(z * NEG_INV_TAU), axis=-1, keepdims=True))
    y = z + TAU * lse                                   # [tb, PROJ_DIM]

    # --- 4) MLP: Linear -> ReLU (eval-mode BatchNorm folded into next Linear) -
    h1 = jnp.maximum(jnp.dot(y, w1, preferred_element_type=jnp.float32) + b1, 0.0)
    h2 = jnp.maximum(jnp.dot(h1, w2, preferred_element_type=jnp.float32) + b2, 0.0)

    # --- 5) output head (BN2 folded into wo/bo) -------------------------------
    out = jnp.dot(h2, wo, preferred_element_type=jnp.float32) + bo
    o_ref[...] = out.astype(o_ref.dtype)


def cyclic_tropical_difference_net(x, slab, *, block_batch=2048, vmem_limit_bytes=None):
    """One pallas_call, two operands (x + param slab). The slab stays resident
    across the batch grid; activations stream. Batch is padded to a multiple of
    the tile, so any batch size gets the performance-optimal tile."""
    b = x.shape[0]
    assert x.shape[1] == INPUT_DIM

    # Batch tile: multiple of 8 sublanes, capped by block_batch.
    tb = min(block_batch, _round_up(b, 8))
    # v7x has 2 TensorCores; give the "parallel" batch axis >= 2 grid steps
    # whenever the batch allows it (no-op on single-TC v5e/v6e).
    if b >= 16 and _round_up(b, tb) // tb < 2:
        tb = _round_up(pl.cdiv(b, 2), 8)
    b_pad = _round_up(b, tb)
    x_p = jnp.pad(x, ((0, b_pad - b), (0, 0))) if b_pad != b else x
    grid = (b_pad // tb,)

    resident = lambda i: (0, 0)   # param slab: same block for every grid step
    # TODO(synk): pipeline_mode=pl.Buffered(1) on the slab spec would drop its
    # redundant second buffer (~76 KB); left at the default for portability.

    cp_kwargs = dict(dimension_semantics=("parallel",))
    if vmem_limit_bytes is not None:
        cp_kwargs["vmem_limit_bytes"] = vmem_limit_bytes

    out = pl.pallas_call(
        _cyclic_tropical_kernel,
        out_shape=jax.ShapeDtypeStruct((b_pad, OUTPUT_DIM), jnp.float32),
        grid_spec=pltpu.PrefetchScalarGridSpec(
            num_scalar_prefetch=0,
            grid=grid,
            in_specs=[
                pl.BlockSpec((tb, INPUT_DIM), lambda i: (i, 0)),
                pl.BlockSpec((SLAB_ROWS, SLAB_LANES), resident),
            ],
            out_specs=pl.BlockSpec((tb, OUTPUT_DIM), lambda i: (i, 0)),
        ),
        compiler_params=pltpu.CompilerParams(**cp_kwargs),
    )(x_p, slab)
    return out[:b] if b_pad != b else out


def init_params(key):
    """PyTorch-style init (U(-1/sqrt(fan_in), +)) plus non-trivial eval-mode
    BatchNorm running stats so the BN folding is actually exercised."""
    def linear(key, fan_in, fan_out):
        k1, k2 = jax.random.split(key)
        bound = 1.0 / jnp.sqrt(fan_in)
        w = jax.random.uniform(k1, (fan_in, fan_out), jnp.float32, -bound, bound)
        b = jax.random.uniform(k2, (fan_out,), jnp.float32, -bound, bound)
        return w, b

    def bn_stats(key, n):
        k1, k2, k3, k4 = jax.random.split(key, 4)
        gamma = jax.random.uniform(k1, (n,), jnp.float32, 0.5, 1.5)
        beta = 0.1 * jax.random.normal(k2, (n,), jnp.float32)
        mean = 0.1 * jax.random.normal(k3, (n,), jnp.float32)
        var = jax.random.uniform(k4, (n,), jnp.float32, 0.5, 1.5)
        return gamma, beta, mean, var

    keys = jax.random.split(key, 6)
    wp, bp = linear(keys[0], INPUT_DIM, PROJ_DIM)
    w1, b1 = linear(keys[1], PROJ_DIM, HIDDEN_DIMS[0])
    w2, b2 = linear(keys[2], HIDDEN_DIMS[0], HIDDEN_DIMS[1])
    wo, bo = linear(keys[3], HIDDEN_DIMS[1], OUTPUT_DIM)
    bn1 = bn_stats(keys[4], HIDDEN_DIMS[0])
    bn2 = bn_stats(keys[5], HIDDEN_DIMS[1])
    return dict(wp=wp, bp=bp, w1=w1, b1=b1, bn1=bn1,
                w2=w2, b2=b2, bn2=bn2, wo=wo, bo=bo)


def prepare_params(params):
    """One-time host-side parameter prep:
    - fold eval-mode BN1 into W2/b2 and BN2 into Wo/bo (BN is affine and sits
      after ReLU, so it folds *forward*):
        W' = s[:,None]*W,  b' = b + (beta - mean*s) @ W,  s = gamma*rsqrt(var+eps)
    - pack every weight matrix and bias vector into one [152, 128] f32 slab
      (a single kernel operand / single DMA)."""
    wp, bp = params["wp"], params["bp"]
    w1, b1 = params["w1"], params["b1"]
    w2, b2 = params["w2"], params["b2"]
    wo, bo = params["wo"], params["bo"]
    g1, be1, m1, v1 = params["bn1"]
    g2, be2, m2, v2 = params["bn2"]

    s1 = g1 * jax.lax.rsqrt(v1 + BN_EPS)
    w2f = w2 * s1[:, None]
    b2f = b2 + (be1 - m1 * s1) @ w2

    s2 = g2 * jax.lax.rsqrt(v2 + BN_EPS)
    wof = wo * s2[:, None]
    bof = bo + (be2 - m2 * s2) @ wo

    slab = jnp.zeros((SLAB_ROWS, SLAB_LANES), jnp.float32)
    slab = slab.at[ROW_WP:ROW_WP + INPUT_DIM, :PROJ_DIM].set(wp)
    slab = slab.at[ROW_W1:ROW_W1 + PROJ_DIM, :HIDDEN_DIMS[0]].set(w1)
    slab = slab.at[ROW_W2:ROW_W2 + HIDDEN_DIMS[0], :HIDDEN_DIMS[1]].set(w2f)
    slab = slab.at[ROW_WO:ROW_WO + HIDDEN_DIMS[1], :OUTPUT_DIM].set(wof)
    slab = slab.at[ROW_BP, :PROJ_DIM].set(bp)
    slab = slab.at[ROW_B1, :HIDDEN_DIMS[0]].set(b1)
    slab = slab.at[ROW_B2, :HIDDEN_DIMS[1]].set(b2f)
    slab = slab.at[ROW_BO, :OUTPUT_DIM].set(bof)
    return slab


def reference_forward(x, params):
    """Pure-JAX reference with *unfused* BN and the explicit pairwise-difference
    logsumexp, for an independent numerical check of the kernel."""
    wp, bp = params["wp"], params["bp"]
    w1, b1 = params["w1"], params["b1"]
    w2, b2 = params["w2"], params["b2"]
    wo, bo = params["wo"], params["bo"]
    g1, be1, m1, v1 = params["bn1"]
    g2, be2, m2, v2 = params["bn2"]

    z = _soft_mod(x @ wp + bp)
    d = z[:, :, None] - z[:, None, :]
    y = TAU * jax.scipy.special.logsumexp(d / TAU, axis=-1)
    h1 = jnp.maximum(y @ w1 + b1, 0.0)
    h1 = (h1 - m1) / jnp.sqrt(v1 + BN_EPS) * g1 + be1
    h2 = jnp.maximum(h1 @ w2 + b2, 0.0)
    h2 = (h2 - m2) / jnp.sqrt(v2 + BN_EPS) * g2 + be2
    return h2 @ wo + bo


if __name__ == "__main__":
    key = jax.random.PRNGKey(0)
    kx, kx2, kp = jax.random.split(key, 3)

    params = init_params(kp)
    slab = prepare_params(params)

    # Small-batch path (single grid step, DMA/overhead bound).
    x = jax.random.normal(kx, (BATCH, INPUT_DIM), jnp.float32)
    out = jax.block_until_ready(cyclic_tropical_difference_net(x, slab))
    ref = reference_forward(x, params)
    assert out.shape == (BATCH, OUTPUT_DIM)
    assert jnp.allclose(out, ref, atol=1e-3, rtol=1e-3), float(jnp.max(jnp.abs(out - ref)))

    # Ragged batch path (exercises padding + a 2-step "parallel" grid).
    x2 = jax.random.normal(kx2, (40, INPUT_DIM), jnp.float32)
    out2 = jax.block_until_ready(cyclic_tropical_difference_net(x2, slab))
    ref2 = reference_forward(x2, params)
    assert out2.shape == (40, OUTPUT_DIM)
    assert jnp.allclose(out2, ref2, atol=1e-3, rtol=1e-3), float(jnp.max(jnp.abs(out2 - ref2)))

    print("KERNEL_OK")
</pallas_src>

<mosaic_0001>
module attributes {stable_mosaic.version = 11 : i64} {
  func.func @_cyclic_tropical_kernel(%arg0: i32, %arg1: memref<8x16xf32, #tpu.memory_space<vmem>>, %arg2: memref<152x128xf32, #tpu.memory_space<vmem>>, %arg3: memref<8x4xf32, #tpu.memory_space<vmem>>) attributes {dimension_semantics = [#tpu.dimension_semantics<parallel>], iteration_bounds = array<i64: 1>, scalar_prefetch = 0 : i64, scratch_operands = 0 : i64, tpu.core_type = #tpu.core_type<tc>, window_params = [{transform_indices = @transform_0, window_bounds = array<i64: 8, 16>}, {pipeline_mode = #tpu.pipeline_mode<synchronous>, transform_indices = @transform_1, window_bounds = array<i64: 152, 128>}, {transform_indices = @transform_2, window_bounds = array<i64: 8, 4>}]} {
    %c0 = arith.constant 0 : index
    %c0_0 = arith.constant 0 : index
    %0 = vector.load %arg1[%c0, %c0_0] : memref<8x16xf32, #tpu.memory_space<vmem>>, vector<8x16xf32>
    %c0_1 = arith.constant 0 : index
    %c0_2 = arith.constant 0 : index
    %1 = vector.load %arg2[%c0_1, %c0_2] : memref<152x128xf32, #tpu.memory_space<vmem>>, vector<152x128xf32>
    %2 = vector.extract_strided_slice %1 {offsets = [0, 0], sizes = [16, 32], strides = [1, 1]} : vector<152x128xf32> to vector<16x32xf32>
    %3 = vector.extract_strided_slice %1 {offsets = [16, 0], sizes = [32, 64], strides = [1, 1]} : vector<152x128xf32> to vector<32x64xf32>
    %4 = vector.extract_strided_slice %1 {offsets = [48, 0], sizes = [64, 32], strides = [1, 1]} : vector<152x128xf32> to vector<64x32xf32>
    %5 = vector.extract_strided_slice %1 {offsets = [112, 0], sizes = [32, 4], strides = [1, 1]} : vector<152x128xf32> to vector<32x4xf32>
    %6 = vector.extract_strided_slice %1 {offsets = [144, 0], sizes = [1, 32], strides = [1, 1]} : vector<152x128xf32> to vector<1x32xf32>
    %7 = vector.extract_strided_slice %1 {offsets = [145, 0], sizes = [1, 64], strides = [1, 1]} : vector<152x128xf32> to vector<1x64xf32>
    %8 = vector.extract_strided_slice %1 {offsets = [146, 0], sizes = [1, 32], strides = [1, 1]} : vector<152x128xf32> to vector<1x32xf32>
    %9 = vector.extract_strided_slice %1 {offsets = [147, 0], sizes = [1, 4], strides = [1, 1]} : vector<152x128xf32> to vector<1x4xf32>
    %cst = arith.constant dense<0.000000e+00> : vector<8x32xf32>
    %10 = tpu.matmul %0, %2, %cst {dimension_numbers = #tpu.dot_dimension_numbers<[1], [0], [0], [1], [0, 0, 1, 1], [], []>} : vector<8x16xf32>, vector<16x32xf32>, vector<8x32xf32> -> vector<8x32xf32>
    %11 = vector.broadcast %6 : vector<1x32xf32> to vector<8x32xf32>
    %12 = arith.addf %10, %11 : vector<8x32xf32>
    %cst_3 = arith.constant 0.142857149 : f32
    %13 = vector.broadcast %cst_3 : f32 to vector<8x32xf32>
    %14 = arith.mulf %12, %13 : vector<8x32xf32>
    %15 = math.floor %14 : vector<8x32xf32>
    %cst_4 = arith.constant 7.000000e+00 : f32
    %16 = vector.broadcast %cst_4 : f32 to vector<8x32xf32>
    %17 = arith.mulf %16, %15 : vector<8x32xf32>
    %18 = arith.subf %12, %17 : vector<8x32xf32>
    %cst_5 = arith.constant -5.000000e+00 : f32
    %19 = vector.broadcast %cst_5 : f32 to vector<8x32xf32>
    %20 = arith.mulf %18, %19 : vector<8x32xf32>
    %21 = math.exp %20 : vector<8x32xf32>
    %cst_6 = arith.constant dense<0.000000e+00> : vector<8xf32>
    %22 = vector.multi_reduction <add>, %21, %cst_6 [1] : vector<8x32xf32> to vector<8xf32>
    %23 = vector.shape_cast %22 : vector<8xf32> to vector<8x1xf32>
    %24 = math.log %23 : vector<8x1xf32>
    %cst_7 = arith.constant 2.000000e-01 : f32
    %25 = vector.broadcast %cst_7 : f32 to vector<8x1xf32>
    %26 = arith.mulf %25, %24 : vector<8x1xf32>
    %27 = vector.broadcast %26 : vector<8x1xf32> to vector<8x32xf32>
    %28 = arith.addf %18, %27 : vector<8x32xf32>
    %cst_8 = arith.constant dense<0.000000e+00> : vector<8x64xf32>
    %29 = tpu.matmul %28, %3, %cst_8 {dimension_numbers = #tpu.dot_dimension_numbers<[1], [0], [0], [1], [0, 0, 1, 1], [], []>} : vector<8x32xf32>, vector<32x64xf32>, vector<8x64xf32> -> vector<8x64xf32>
    %30 = vector.broadcast %7 : vector<1x64xf32> to vector<8x64xf32>
    %31 = arith.addf %29, %30 : vector<8x64xf32>
    %cst_9 = arith.constant 0.000000e+00 : f32
    %32 = vector.broadcast %cst_9 : f32 to vector<8x64xf32>
    %33 = arith.maximumf %31, %32 : vector<8x64xf32>
    %cst_10 = arith.constant dense<0.000000e+00> : vector<8x32xf32>
    %34 = tpu.matmul %33, %4, %cst_10 {dimension_numbers = #tpu.dot_dimension_numbers<[1], [0], [0], [1], [0, 0, 1, 1], [], []>} : vector<8x64xf32>, vector<64x32xf32>, vector<8x32xf32> -> vector<8x32xf32>
    %35 = vector.broadcast %8 : vector<1x32xf32> to vector<8x32xf32>
    %36 = arith.addf %34, %35 : vector<8x32xf32>
    %cst_11 = arith.constant 0.000000e+00 : f32
    %37 = vector.broadcast %cst_11 : f32 to vector<8x32xf32>
    %38 = arith.maximumf %36, %37 : vector<8x32xf32>
    %cst_12 = arith.constant dense<0.000000e+00> : vector<8x4xf32>
    %39 = tpu.matmul %38, %5, %cst_12 {dimension_numbers = #tpu.dot_dimension_numbers<[1], [0], [0], [1], [0, 0, 1, 1], [], []>} : vector<8x32xf32>, vector<32x4xf32>, vector<8x4xf32> -> vector<8x4xf32>
    %40 = vector.broadcast %9 : vector<1x4xf32> to vector<8x4xf32>
    %41 = arith.addf %39, %40 : vector<8x4xf32>
    %c0_13 = arith.constant 0 : index
    %c0_14 = arith.constant 0 : index
    %42 = vector.load %arg3[%c0_13, %c0_14] : memref<8x4xf32, #tpu.memory_space<vmem>>, vector<8x4xf32>
    tpu.vector_store %arg3[%c0_13, %c0_14], %41 {strides = array<i32>} : memref<8x4xf32, #tpu.memory_space<vmem>>, vector<8x4xf32>,
    return
  }
  func.func @transform_0(%arg0: i32) -> (i32, i32) {
    %c0_i32 = arith.constant 0 : i32
    %c0_i32_0 = arith.constant 0 : i32
    return %arg0, %c0_i32 : i32, i32
  }
  func.func @transform_1(%arg0: i32) -> (i32, i32) {
    %c0_i32 = arith.constant 0 : i32
    %c0_i32_0 = arith.constant 0 : i32
    %c0_i32_1 = arith.constant 0 : i32
    return %c0_i32, %c0_i32_0 : i32, i32
  }
  func.func @transform_2(%arg0: i32) -> (i32, i32) {
    %c0_i32 = arith.constant 0 : i32
    %c0_i32_0 = arith.constant 0 : i32
    return %arg0, %c0_i32 : i32, i32
  }
}

</mosaic_0001>

<llo_original>
// kernel: tpu_custom_call.1
$region0: #{tpu_custom_call.1}
  #allocation0 [shape = 'u32[]', space=smem, size = 0x4, offset = 0x4, fixed_abs, tag = 'smem constant byte address 0x4 - core index']
  #allocation1 [shape = 'u32[144,128]{1,0:T(1,128)}', space=vmem, size = 0x12000, scoped, tag = 'internal scratch']
  %s0 = inlined_call_operand.hbm [shape: f32[8,16], index: 0, kind: input, shape index: {}]
  %s1 = inlined_call_operand.hbm [shape: f32[152,128], index: 1, kind: input, shape index: {}]
  %s2 = inlined_call_operand.vmem [shape: f32[8,4], index: 2, kind: output, shape index: {}]
  %s3 = sld [smem:[#allocation0]]
  $region26: #{tpu_custom_call.1} parent=0
    _
  %s5 = ssub.s32 1, %s3
  %s6 = scalar_select 0, %s5, %s3
  $region1: #{tpu_custom_call.1} parent=0
    #allocation2 [shape = 'u8[4096]{0}', space=vmem, size = 0x1000, scoped, tag = 'input window, operand 0, single buffered']
    #allocation3 [shape = 's32[1]{0}', space=sflag, size = 0x4, scoped, tag = 'scoped memory for tpu_custom_call.1']
    #allocation4 [shape = 'u8[77824]{0}', space=vmem, size = 0x13000, scoped, tag = 'input window, operand 1, single buffered']
    #allocation5 [shape = 's32[1]{0}', space=sflag, size = 0x4, scoped, tag = 'scoped memory for tpu_custom_call.1']
    %7 = vsyncpa [#allocation3], 0
    %8 = vsyncpa [#allocation5], 0
    // Predicated region
    $region2: #{tpu_custom_call.1} parent=1 // pred_check
      _
    $region3: #{tpu_custom_call.1} parent=1 // pred_check_branch
      %10 = sbr.rel (0) target = $region5
    $region4: #{tpu_custom_call.1} parent=1 // pred_region
      %s12 = ssub.s32 128, 128
      %13 = vsyncadd [#allocation3], %s12
      %s15 = sshll.u32 [#allocation2], 4
      %s16 = int_to_ptr.vmem [resolvable:$true] %s15
      %18 = dma.hbm_to_vmem [thread:$0]  %s0, 128, %s16, [#allocation3]
    $region5: #{tpu_custom_call.1} parent=1 // pred_fallthru
      _
    // Predicated region
    $region6: #{tpu_custom_call.1} parent=1 // pred_check
      _
    $region7: #{tpu_custom_call.1} parent=1 // pred_check_branch
      %20 = sbr.rel (0) target = $region9
    $region8: #{tpu_custom_call.1} parent=1 // pred_region
      %s22 = ssub.s32 2432, 2432
      %23 = vsyncadd [#allocation5], %s22
      %s24 = sshll.u32 [#allocation4], 4
      %s25 = int_to_ptr.vmem [resolvable:$true] %s24
      %30 = dma.hbm_to_vmem [thread:$0]  %s1, 2432, %s25, [#allocation5], 128, 128, 8
    $region9: #{tpu_custom_call.1} parent=1 // pred_fallthru
      _
    // Predicated region
    $region10: #{tpu_custom_call.1} parent=1 // pred_check
      _
    $region11: #{tpu_custom_call.1} parent=1 // pred_check_branch
      %32 = sbr.rel (0) target = $region13
    $region12: #{tpu_custom_call.1} parent=1 // pred_region
      %33 = dma.done [#allocation3], 128
    $region13: #{tpu_custom_call.1} parent=1 // pred_fallthru
      _
    // Predicated region
    $region14: #{tpu_custom_call.1} parent=1 // pred_check
      _
    $region15: #{tpu_custom_call.1} parent=1 // pred_check_branch
      %35 = sbr.rel (0) target = $region17
    $region16: #{tpu_custom_call.1} parent=1 // pred_region
      %36 = dma.done [#allocation5], 2432
    $region17: #{tpu_custom_call.1} parent=1 // pred_fallthru
      _
    %v37 = vld [vmem:[#allocation2] sm:$0xff]
    %v38 = vld [vmem:[#allocation4] sm:$0xff]
    %v39 = vld [vmem:[#allocation4 + $0x8] sm:$0xff]
    %v40 = vld [vmem:[#allocation4 + $0x10] sm:$0xff]
    %v41 = vld [vmem:[#allocation4 + $0x18] sm:$0xff]
    %v42 = vld [vmem:[#allocation4 + $0x20] sm:$0xff]
    %v43 = vld [vmem:[#allocation4 + $0x28] sm:$0xff]
    %v44 = vld [vmem:[#allocation4 + $0x30] sm:$0xff]
    %v45 = vld [vmem:[#allocation4 + $0x38] sm:$0xff]
    %v46 = vld [vmem:[#allocation4 + $0x40] sm:$0xff]
    %v47 = vld [vmem:[#allocation4 + $0x48] sm:$0xff]
    %v48 = vld [vmem:[#allocation4 + $0x50] sm:$0xff]
    %v49 = vld [vmem:[#allocation4 + $0x58] sm:$0xff]
    %v50 = vld [vmem:[#allocation4 + $0x60] sm:$0xff]
    %v51 = vld [vmem:[#allocation4 + $0x68] sm:$0xff]
    %v52 = vld [vmem:[#allocation4 + $0x70] sm:$0xff]
    %v53 = vld [vmem:[#allocation4 + $0x78] sm:$0xff]
    %v54 = vld [vmem:[#allocation4 + $0x80] sm:$0xff]
    %v55 = vld [vmem:[#allocation4 + $0x88] sm:$0xff]
    %v56 = vld [vmem:[#allocation4 + $0x90] sm:$0xff]
    %v57 = vlaneseq
    %v58 = vshrl.u32 %v57, 7
    %v59 = vsub.s32 0, %v58
    %v60 = vrot.slane %v56, %v59
    %vm61 = vcmask 130048
    %v63 = vsel %vm61, %v37, 0
    %65 = vmatprep.subr.mxu0 0.0
    %66 = vmatpush1.msra.mxu0 0.0
    %67 = vmatprep.subr.mxu0 0.0
    %68 = vmatpush1.msra.mxu0 0.0
    %69 = vmatprep.subr.mxu0 0.0
    %70 = vmatpush1.msra.mxu0 0.0
    %71 = vmatprep.subr.mxu0 0.0
    %72 = vmatpush1.msra.mxu0 0.0
    %73 = vmatprep.subr.mxu0 0.0
    %74 = vmatpush1.msra.mxu0 0.0
    %75 = vmatprep.subr.mxu0 0.0
    %76 = vmatpush1.msra.mxu0 0.0
    %77 = vmatprep.subr.mxu0 0.0
    %78 = vmatpush1.msra.mxu0 0.0
    %79 = vmatprep.subr.mxu0 0.0
    %80 = vmatpush1.msra.mxu0 0.0
    %81 = vmatprep.subr.mxu0 0.0
    %82 = vmatpush1.msra.mxu0 0.0
    %83 = vmatprep.subr.mxu0 0.0
    %84 = vmatpush1.msra.mxu0 0.0
    %85 = vmatprep.subr.mxu0 0.0
    %86 = vmatpush1.msra.mxu0 0.0
    %87 = vmatprep.subr.mxu0 0.0
    %88 = vmatpush1.msra.mxu0 0.0
    %89 = vmatprep.subr.mxu0 0.0
    %90 = vmatpush1.msra.mxu0 0.0
    %91 = vmatprep.subr.mxu0 0.0
    %92 = vmatpush1.msra.mxu0 0.0
    %93 = vmatprep.subr.mxu0 0.0
    %94 = vmatpush1.msra.mxu0 %v39
    %95 = vmatprep.subr.mxu0 0.0
    %96 = vmatpush1.msra.mxu0 %v38
    %97 = vmatprep.subr.mxu0 0.0
    %98 = vmatpush2.msra.mxu0 0.0
    %99 = vmatprep.subr.mxu0 0.0
    %100 = vmatpush2.msra.mxu0 0.0
    %101 = vmatprep.subr.mxu0 0.0
    %102 = vmatpush2.msra.mxu0 0.0
    %103 = vmatprep.subr.mxu0 0.0
    %104 = vmatpush2.msra.mxu0 0.0
    %105 = vmatprep.subr.mxu0 0.0
    %106 = vmatpush2.msra.mxu0 0.0
    %107 = vmatprep.subr.mxu0 0.0
    %108 = vmatpush2.msra.mxu0 0.0
    %109 = vmatprep.subr.mxu0 0.0
    %110 = vmatpush2.msra.mxu0 0.0
    %111 = vmatprep.subr.mxu0 0.0
    %112 = vmatpush2.msra.mxu0 0.0
    %113 = vmatprep.subr.mxu0 0.0
    %114 = vmatpush2.msra.mxu0 0.0
    %115 = vmatprep.subr.mxu0 0.0
    %116 = vmatpush2.msra.mxu0 0.0
    %117 = vmatprep.subr.mxu0 0.0
    %118 = vmatpush2.msra.mxu0 0.0
    %119 = vmatprep.subr.mxu0 0.0
    %120 = vmatpush2.msra.mxu0 0.0
    %121 = vmatprep.subr.mxu0 0.0
    %122 = vmatpush2.msra.mxu0 0.0
    %123 = vmatprep.subr.mxu0 0.0
    %124 = vmatpush2.msra.mxu0 0.0
    %125 = vmatprep.subr.mxu0 0.0
    %126 = vmatpush2.msra.mxu0 0.0
    %127 = vmatprep.subr.mxu0 0.0
    %128 = vmatpush2.msra.mxu0 0.0
    %129 = vmatprep.mubr.f32.mxu0 0.0
    %130 = vmatmul.mubr.f32.gmra.mxu0 %v63
    %v131 = vpop.f32.mrf.mxu0
    %v132 = vadd.f32 %v60, %v131
    %v133 = vpop.f32.mrf.mxu0
    %134 = vdwg.mxu0
    %v135 = vmul.f32 %v132, 0.14285715
    %v136 = vfloor.f32 %v135
    %v137 = vmul.f32 %v136, 7.0
    %v138 = vsub.f32 %v132, %v137
    %v139 = vmul.f32 %v138, -5.0
    %v140 = vmul.f32 %v139, 1.442695
    %v141 = vpow.pop %v140
    %vm142 = vcmask 261120
    %v143 = vsel %vm142, %v141, 0.0
    %144 = vadd.xlane.f32.xlu0 %v143
    %v145 = vpop.xlane.xlu0 %144
    %v146 = vlog2.pop %v145
    %v147 = vmul.f32 %v146, 0.6931472
    %v148 = vmul.f32 %v147, 0.2
    %v149 = vadd.f32 %v138, %v148
    %v150 = vlaneseq
    %v151 = vshrl.u32 %v150, 7
    %v152 = vsub.s32 1, %v151
    %v153 = vrot.slane %v56, %v152
    %v155 = vsel %vm142, %v149, 0
    %157 = vmatprep.subr.mxu0 0.0
    %158 = vmatpush1.msra.mxu0 0.0
    %159 = vmatprep.subr.mxu0 0.0
    %160 = vmatpush1.msra.mxu0 0.0
    %161 = vmatprep.subr.mxu0 0.0
    %162 = vmatpush1.msra.mxu0 0.0
    %163 = vmatprep.subr.mxu0 0.0
    %164 = vmatpush1.msra.mxu0 0.0
    %165 = vmatprep.subr.mxu0 0.0
    %166 = vmatpush1.msra.mxu0 0.0
    %167 = vmatprep.subr.mxu0 0.0
    %168 = vmatpush1.msra.mxu0 0.0
    %169 = vmatprep.subr.mxu0 0.0
    %170 = vmatpush1.msra.mxu0 0.0
    %171 = vmatprep.subr.mxu0 0.0
    %172 = vmatpush1.msra.mxu0 0.0
    %173 = vmatprep.subr.mxu0 0.0
    %174 = vmatpush1.msra.mxu0 0.0
    %175 = vmatprep.subr.mxu0 0.0
    %176 = vmatpush1.msra.mxu0 0.0
    %177 = vmatprep.subr.mxu0 0.0
    %178 = vmatpush1.msra.mxu0 0.0
    %179 = vmatprep.subr.mxu0 0.0
    %180 = vmatpush1.msra.mxu0 0.0
    %181 = vmatprep.subr.mxu0 0.0
    %182 = vmatpush1.msra.mxu0 %v43
    %183 = vmatprep.subr.mxu0 0.0
    %184 = vmatpush1.msra.mxu0 %v42
    %185 = vmatprep.subr.mxu0 0.0
    %186 = vmatpush1.msra.mxu0 %v41
    %187 = vmatprep.subr.mxu0 0.0
    %188 = vmatpush1.msra.mxu0 %v40
    %189 = vmatprep.subr.mxu0 0.0
    %190 = vmatpush2.msra.mxu0 0.0
    %191 = vmatprep.subr.mxu0 0.0
    %192 = vmatpush2.msra.mxu0 0.0
    %193 = vmatprep.subr.mxu0 0.0
    %194 = vmatpush2.msra.mxu0 0.0
    %195 = vmatprep.subr.mxu0 0.0
    %196 = vmatpush2.msra.mxu0 0.0
    %197 = vmatprep.subr.mxu0 0.0
    %198 = vmatpush2.msra.mxu0 0.0
    %199 = vmatprep.subr.mxu0 0.0
    %200 = vmatpush2.msra.mxu0 0.0
    %201 = vmatprep.subr.mxu0 0.0
    %202 = vmatpush2.msra.mxu0 0.0
    %203 = vmatprep.subr.mxu0 0.0
    %204 = vmatpush2.msra.mxu0 0.0
    %205 = vmatprep.subr.mxu0 0.0
    %206 = vmatpush2.msra.mxu0 0.0
    %207 = vmatprep.subr.mxu0 0.0
    %208 = vmatpush2.msra.mxu0 0.0
    %209 = vmatprep.subr.mxu0 0.0
    %210 = vmatpush2.msra.mxu0 0.0
    %211 = vmatprep.subr.mxu0 0.0
    %212 = vmatpush2.msra.mxu0 0.0
    %213 = vmatprep.subr.mxu0 0.0
    %214 = vmatpush2.msra.mxu0 0.0
    %215 = vmatprep.subr.mxu0 0.0
    %216 = vmatpush2.msra.mxu0 0.0
    %217 = vmatprep.subr.mxu0 0.0
    %218 = vmatpush2.msra.mxu0 0.0
    %219 = vmatprep.subr.mxu0 0.0
    %220 = vmatpush2.msra.mxu0 0.0
    %221 = vmatprep.mubr.f32.mxu0 0.0
    %222 = vmatmul.mubr.f32.gmra.mxu0 %v155
    %v223 = vpop.f32.mrf.mxu0
    %v224 = vadd.f32 %v153, %v223
    %v225 = vpop.f32.mrf.mxu0
    %226 = vdwg.mxu0
    %v227 = vmax.f32 %v224, 0.0
    %v228 = vlaneseq
    %v229 = vshrl.u32 %v228, 7
    %v230 = vsub.s32 2, %v229
    %v231 = vrot.slane %v56, %v230
    %vm232 = vcmask 523264
    %v234 = vsel %vm232, %v227, 0
    %236 = vmatprep.subr.mxu0 0.0
    %237 = vmatpush1.msra.mxu0 0.0
    %238 = vmatprep.subr.mxu0 0.0
    %239 = vmatpush1.msra.mxu0 0.0
    %240 = vmatprep.subr.mxu0 0.0
    %241 = vmatpush1.msra.mxu0 0.0
    %242 = vmatprep.subr.mxu0 0.0
    %243 = vmatpush1.msra.mxu0 0.0
    %244 = vmatprep.subr.mxu0 0.0
    %245 = vmatpush1.msra.mxu0 0.0
    %246 = vmatprep.subr.mxu0 0.0
    %247 = vmatpush1.msra.mxu0 0.0
    %248 = vmatprep.subr.mxu0 0.0
    %249 = vmatpush1.msra.mxu0 0.0
    %250 = vmatprep.subr.mxu0 0.0
    %251 = vmatpush1.msra.mxu0 0.0
    %252 = vmatprep.subr.mxu0 0.0
    %253 = vmatpush1.msra.mxu0 %v51
    %254 = vmatprep.subr.mxu0 0.0
    %255 = vmatpush1.msra.mxu0 %v50
    %256 = vmatprep.subr.mxu0 0.0
    %257 = vmatpush1.msra.mxu0 %v49
    %258 = vmatprep.subr.mxu0 0.0
    %259 = vmatpush1.msra.mxu0 %v48
    %260 = vmatprep.subr.mxu0 0.0
    %261 = vmatpush1.msra.mxu0 %v47
    %262 = vmatprep.subr.mxu0 0.0
    %263 = vmatpush1.msra.mxu0 %v46
    %264 = vmatprep.subr.mxu0 0.0
    %265 = vmatpush1.msra.mxu0 %v45
    %266 = vmatprep.subr.mxu0 0.0
    %267 = vmatpush1.msra.mxu0 %v44
    %268 = vmatprep.subr.mxu0 0.0
    %269 = vmatpush2.msra.mxu0 0.0
    %270 = vmatprep.subr.mxu0 0.0
    %271 = vmatpush2.msra.mxu0 0.0
    %272 = vmatprep.subr.mxu0 0.0
    %273 = vmatpush2.msra.mxu0 0.0
    %274 = vmatprep.subr.mxu0 0.0
    %275 = vmatpush2.msra.mxu0 0.0
    %276 = vmatprep.subr.mxu0 0.0
    %277 = vmatpush2.msra.mxu0 0.0
    %278 = vmatprep.subr.mxu0 0.0
    %279 = vmatpush2.msra.mxu0 0.0
    %280 = vmatprep.subr.mxu0 0.0
    %281 = vmatpush2.msra.mxu0 0.0
    %282 = vmatprep.subr.mxu0 0.0
    %283 = vmatpush2.msra.mxu0 0.0
    %284 = vmatprep.subr.mxu0 0.0
    %285 = vmatpush2.msra.mxu0 0.0
    %286 = vmatprep.subr.mxu0 0.0
    %287 = vmatpush2.msra.mxu0 0.0
    %288 = vmatprep.subr.mxu0 0.0
    %289 = vmatpush2.msra.mxu0 0.0
    %290 = vmatprep.subr.mxu0 0.0
    %291 = vmatpush2.msra.mxu0 0.0
    %292 = vmatprep.subr.mxu0 0.0
    %293 = vmatpush2.msra.mxu0 0.0
    %294 = vmatprep.subr.mxu0 0.0
    %295 = vmatpush2.msra.mxu0 0.0
    %296 = vmatprep.subr.mxu0 0.0
    %297 = vmatpush2.msra.mxu0 0.0
    %298 = vmatprep.subr.mxu0 0.0
    %299 = vmatpush2.msra.mxu0 0.0
    %300 = vmatprep.mubr.f32.mxu0 0.0
    %301 = vmatmul.mubr.f32.gmra.mxu0 %v234
    %v302 = vpop.f32.mrf.mxu0
    %v303 = vadd.f32 %v231, %v302
    %v304 = vpop.f32.mrf.mxu0
    %305 = vdwg.mxu0
    %v306 = vmax.f32 %v303, 0.0
    %v307 = vlaneseq
    %v308 = vshrl.u32 %v307, 7
    %v309 = vsub.s32 3, %v308
    %v310 = vrot.slane %v56, %v309
    %v312 = vsel %vm142, %v306, 0
    %314 = vmatprep.subr.mxu0 0.0
    %315 = vmatpush1.msra.mxu0 0.0
    %316 = vmatprep.subr.mxu0 0.0
    %317 = vmatpush1.msra.mxu0 0.0
    %318 = vmatprep.subr.mxu0 0.0
    %319 = vmatpush1.msra.mxu0 0.0
    %320 = vmatprep.subr.mxu0 0.0
    %321 = vmatpush1.msra.mxu0 0.0
    %322 = vmatprep.subr.mxu0 0.0
    %323 = vmatpush1.msra.mxu0 0.0
    %324 = vmatprep.subr.mxu0 0.0
    %325 = vmatpush1.msra.mxu0 0.0
    %326 = vmatprep.subr.mxu0 0.0
    %327 = vmatpush1.msra.mxu0 0.0
    %328 = vmatprep.subr.mxu0 0.0
    %329 = vmatpush1.msra.mxu0 0.0
    %330 = vmatprep.subr.mxu0 0.0
    %331 = vmatpush1.msra.mxu0 0.0
    %332 = vmatprep.subr.mxu0 0.0
    %333 = vmatpush1.msra.mxu0 0.0
    %334 = vmatprep.subr.mxu0 0.0
    %335 = vmatpush1.msra.mxu0 0.0
    %336 = vmatprep.subr.mxu0 0.0
    %337 = vmatpush1.msra.mxu0 0.0
    %338 = vmatprep.subr.mxu0 0.0
    %339 = vmatpush1.msra.mxu0 %v55
    %340 = vmatprep.subr.mxu0 0.0
    %341 = vmatpush1.msra.mxu0 %v54
    %342 = vmatprep.subr.mxu0 0.0
    %343 = vmatpush1.msra.mxu0 %v53
    %344 = vmatprep.subr.mxu0 0.0
    %345 = vmatpush1.msra.mxu0 %v52
    %346 = vmatprep.subr.mxu0 0.0
    %347 = vmatpush2.msra.mxu0 0.0
    %348 = vmatprep.subr.mxu0 0.0
    %349 = vmatpush2.msra.mxu0 0.0
    %350 = vmatprep.subr.mxu0 0.0
    %351 = vmatpush2.msra.mxu0 0.0
    %352 = vmatprep.subr.mxu0 0.0
    %353 = vmatpush2.msra.mxu0 0.0
    %354 = vmatprep.subr.mxu0 0.0
    %355 = vmatpush2.msra.mxu0 0.0
    %356 = vmatprep.subr.mxu0 0.0
    %357 = vmatpush2.msra.mxu0 0.0
    %358 = vmatprep.subr.mxu0 0.0
    %359 = vmatpush2.msra.mxu0 0.0
    %360 = vmatprep.subr.mxu0 0.0
    %361 = vmatpush2.msra.mxu0 0.0
    %362 = vmatprep.subr.mxu0 0.0
    %363 = vmatpush2.msra.mxu0 0.0
    %364 = vmatprep.subr.mxu0 0.0
    %365 = vmatpush2.msra.mxu0 0.0
    %366 = vmatprep.subr.mxu0 0.0
    %367 = vmatpush2.msra.mxu0 0.0
    %368 = vmatprep.subr.mxu0 0.0
    %369 = vmatpush2.msra.mxu0 0.0
    %370 = vmatprep.subr.mxu0 0.0
    %371 = vmatpush2.msra.mxu0 0.0
    %372 = vmatprep.subr.mxu0 0.0
    %373 = vmatpush2.msra.mxu0 0.0
    %374 = vmatprep.subr.mxu0 0.0
    %375 = vmatpush2.msra.mxu0 0.0
    %376 = vmatprep.subr.mxu0 0.0
    %377 = vmatpush2.msra.mxu0 0.0
    %378 = vmatprep.mubr.f32.mxu0 0.0
    %379 = vmatmul.mubr.f32.gmra.mxu0 %v312
    %v380 = vpop.f32.mrf.mxu0
    %v381 = vadd.f32 %v310, %v380
    %v382 = vpop.f32.mrf.mxu0
    %383 = vdwg.mxu0
    %vm384 = vcmask 31744
    %385 = vst.msk [vmem:[%s2] sm:$0xff] %vm384, %v381
    // Predicated region
    $region18: #{tpu_custom_call.1} parent=1 // pred_check
      _
    $region19: #{tpu_custom_call.1} parent=1 // pred_check_branch
      %387 = sbr.rel (0) target = $region21
    $region20: #{tpu_custom_call.1} parent=1 // pred_region
      _
    $region21: #{tpu_custom_call.1} parent=1 // pred_fallthru
      _
    // Predicated region
    $region22: #{tpu_custom_call.1} parent=1 // pred_check
      _
    $region23: #{tpu_custom_call.1} parent=1 // pred_check_branch
      %389 = sbr.rel (0) target = $region25
    $region24: #{tpu_custom_call.1} parent=1 // pred_region
      _
    $region25: #{tpu_custom_call.1} parent=1 // pred_fallthru
      _
    %390 = vsyncpa [#allocation3], 1
    %391 = vsyncpa [#allocation5], 1

</llo_original>
